<compile_context>
chip_gen: v6e
topology: v6e:2x2x1
jax: 0.10.0
libtpu: 0.0.40
codegen_flags: <defaults>
</compile_context>

<pallas_src>
import jax
import jax.numpy as jnp
from jax.experimental import pallas as pl
from jax.experimental.pallas import tpu as pltpu

LANE = 128  # pad the output feature axis to one full vreg lane width


def _linear_softmax_kernel(x_ref, w_ref, b_ref, o_ref):
    # x: (B, 20), w: (20, 128) zero-padded, b: (1, 128) with -1e30 in pad lanes.
    logits = jnp.dot(x_ref[...], w_ref[...], preferred_element_type=jnp.float32)
    logits = logits + b_ref[...]
    # numerically-stable softmax over the (padded) feature axis; pad lanes have
    # logit -1e30 -> exp underflows to 0 and does not touch the denominator.
    m = jnp.max(logits, axis=-1, keepdims=True)
    e = jnp.exp(logits - m)
    denom = jnp.sum(e, axis=-1, keepdims=True)
    inv = pl.reciprocal(denom, approx=True)      # EUP vrcp (free slot)
    inv = inv * (2.0 - denom * inv)              # one Newton step -> ~f32 accuracy
    o_ref[...] = (e * inv).astype(o_ref.dtype)


def boring_model_forward(x, w, b):
    """x: (B, 20) f32; w: (out=20, in=20) f32 (PyTorch Linear layout); b: (20,) f32."""
    B, D_in = x.shape
    D_out = w.shape[0]

    # Pre-transpose to (in, out) and zero-pad the out dim to 128 lanes.
    w_t = w.T                                                    # (in, out)
    w_pad = jnp.zeros((D_in, LANE), jnp.float32).at[:, :D_out].set(w_t)
    # Padded bias lanes get a large negative so they vanish in the softmax.
    b_pad = jnp.full((1, LANE), -1e30, jnp.float32).at[0, :D_out].set(b)

    cost = pl.CostEstimate(
        flops=2 * B * D_in * LANE,
        transcendentals=B * LANE,
        bytes_accessed=4 * (B * D_in + D_in * LANE + LANE + B * LANE),
    )

    out_pad = pl.pallas_call(
        _linear_softmax_kernel,
        out_shape=jax.ShapeDtypeStruct((B, LANE), jnp.float32),
        in_specs=[
            pl.BlockSpec(memory_space=pltpu.MemorySpace.VMEM),
            pl.BlockSpec(memory_space=pltpu.MemorySpace.VMEM),
            pl.BlockSpec(memory_space=pltpu.MemorySpace.VMEM),
        ],
        out_specs=pl.BlockSpec(memory_space=pltpu.MemorySpace.VMEM),
        cost_estimate=cost,
    )(x, w_pad, b_pad)
    return out_pad[:, :D_out]


if __name__ == "__main__":
    key = jax.random.PRNGKey(0)
    k_x, k_w, k_b = jax.random.split(key, 3)

    B, D = 8, 20  # small batch, Linear(20, 20)

    # Deterministic parameter init (mimics PyTorch's uniform(-1/sqrt(in), 1/sqrt(in)))
    bound = 1.0 / jnp.sqrt(jnp.float32(D))
    w = jax.random.uniform(k_w, (D, D), jnp.float32, -bound, bound)  # (out, in)
    b = jax.random.uniform(k_b, (D,), jnp.float32, -bound, bound)
    x = jax.random.normal(k_x, (B, D), jnp.float32)

    out = boring_model_forward(x, w, b)
    out = jax.block_until_ready(out)

    # sanity check against plain-JAX reference (x @ W.T + b, softmax over dim=1)
    ref = jax.nn.softmax(x @ w.T + b, axis=-1)
    assert jnp.allclose(out, ref, atol=1e-5, rtol=1e-5), "mismatch vs reference"
    assert jnp.allclose(jnp.sum(out, axis=-1), 1.0, atol=1e-5), "softmax rows must sum to 1"

    print("KERNEL_OK")
</pallas_src>

<mosaic_0001>
module attributes {stable_mosaic.version = 11 : i64} {
  func.func @_linear_softmax_kernel(%arg0: memref<8x20xf32, #tpu.memory_space<vmem>>, %arg1: memref<20x128xf32, #tpu.memory_space<vmem>>, %arg2: memref<1x128xf32, #tpu.memory_space<vmem>>, %arg3: memref<8x128xf32, #tpu.memory_space<vmem>>) attributes {dimension_semantics = [], scalar_prefetch = 0 : i64, scratch_operands = 0 : i64, tpu.core_type = #tpu.core_type<tc>} {
    %c0 = arith.constant 0 : index
    %c0_0 = arith.constant 0 : index
    %0 = vector.load %arg0[%c0, %c0_0] : memref<8x20xf32, #tpu.memory_space<vmem>>, vector<8x20xf32>
    %c0_1 = arith.constant 0 : index
    %c0_2 = arith.constant 0 : index
    %1 = vector.load %arg1[%c0_1, %c0_2] : memref<20x128xf32, #tpu.memory_space<vmem>>, vector<20x128xf32>
    %cst = arith.constant dense<0.000000e+00> : vector<8x128xf32>
    %2 = tpu.matmul %0, %1, %cst {dimension_numbers = #tpu.dot_dimension_numbers<[1], [0], [0], [1], [0, 0, 1, 1], [], []>} : vector<8x20xf32>, vector<20x128xf32>, vector<8x128xf32> -> vector<8x128xf32>
    %c0_3 = arith.constant 0 : index
    %c0_4 = arith.constant 0 : index
    %3 = vector.load %arg2[%c0_3, %c0_4] : memref<1x128xf32, #tpu.memory_space<vmem>>, vector<1x128xf32>
    %4 = vector.broadcast %3 : vector<1x128xf32> to vector<8x128xf32>
    %5 = arith.addf %2, %4 : vector<8x128xf32>
    %cst_5 = arith.constant dense<0xFF800000> : vector<8xf32>
    %6 = vector.multi_reduction <maximumf>, %5, %cst_5 [1] : vector<8x128xf32> to vector<8xf32>
    %7 = vector.shape_cast %6 : vector<8xf32> to vector<8x1xf32>
    %8 = vector.broadcast %7 : vector<8x1xf32> to vector<8x128xf32>
    %9 = arith.subf %5, %8 : vector<8x128xf32>
    %10 = math.exp %9 : vector<8x128xf32>
    %cst_6 = arith.constant dense<0.000000e+00> : vector<8xf32>
    %11 = vector.multi_reduction <add>, %10, %cst_6 [1] : vector<8x128xf32> to vector<8xf32>
    %12 = vector.shape_cast %11 : vector<8xf32> to vector<8x1xf32>
    %13 = tpu.reciprocal %12 {approx = true} : vector<8x1xf32> -> vector<8x1xf32>
    %14 = arith.mulf %12, %13 : vector<8x1xf32>
    %cst_7 = arith.constant 2.000000e+00 : f32
    %15 = vector.broadcast %cst_7 : f32 to vector<8x1xf32>
    %16 = arith.subf %15, %14 : vector<8x1xf32>
    %17 = arith.mulf %13, %16 : vector<8x1xf32>
    %18 = vector.broadcast %17 : vector<8x1xf32> to vector<8x128xf32>
    %19 = arith.mulf %10, %18 : vector<8x128xf32>
    %c0_8 = arith.constant 0 : index
    %c0_9 = arith.constant 0 : index
    %20 = vector.load %arg3[%c0_8, %c0_9] : memref<8x128xf32, #tpu.memory_space<vmem>>, vector<8x128xf32>
    tpu.vector_store %arg3[%c0_8, %c0_9], %19 {strides = array<i32>} : memref<8x128xf32, #tpu.memory_space<vmem>>, vector<8x128xf32>,
    return
  }
}

</mosaic_0001>

<llo_original>
// kernel: tpu_custom_call.1
$region0: #{tpu_custom_call.1}
  #allocation0 [shape = 'u32[]', space=smem, size = 0x4, offset = 0x4, fixed_abs, tag = 'smem constant byte address 0x4 - core index']
  #allocation1 [shape = 'u32[144,128]{1,0:T(1,128)}', space=vmem, size = 0x12000, scoped, tag = 'internal scratch']
  %s0 = inlined_call_operand.hbm [shape: f32[8,20], index: 0, kind: input, shape index: {}]
  %s1 = inlined_call_operand.hbm [shape: f32[20,128], index: 1, kind: input, shape index: {}]
  %s2 = inlined_call_operand.vmem [shape: f32[1,128], index: 2, kind: input, shape index: {}]
  %s3 = inlined_call_operand.hbm [shape: f32[8,128], index: 3, kind: output, shape index: {}]
  %s4 = sld [smem:[#allocation0]]
  $region30: #{tpu_custom_call.1} parent=0
    _
  %s6 = ssub.s32 1, %s4
  %s7 = scalar_select 0, %s6, %s4
  $region1: #{tpu_custom_call.1} parent=0
    #allocation2 [shape = 'u8[4096]{0}', space=vmem, size = 0x1000, scoped, tag = 'input window, operand 0, single buffered']
    #allocation3 [shape = 's32[1]{0}', space=sflag, size = 0x4, scoped, tag = 'scoped memory for tpu_custom_call.1']
    #allocation4 [shape = 's32[1]{0}', space=sflag, size = 0x4, scoped, tag = 'scoped memory for tpu_custom_call.1']
    #allocation5 [shape = 'u8[12288]{0}', space=vmem, size = 0x3000, scoped, tag = 'input window, operand 1, single buffered']
    #allocation6 [shape = 's32[1]{0}', space=sflag, size = 0x4, scoped, tag = 'scoped memory for tpu_custom_call.1']
    #allocation7 [shape = 'u8[4096]{0}', space=vmem, size = 0x1000, scoped, tag = 'output window, operand 0, single buffered']
    %8 = vsyncpa [#allocation3], 0
    %9 = vsyncpa [#allocation6], 0
    %10 = vsyncpa [#allocation4], 0
    // Predicated region
    $region2: #{tpu_custom_call.1} parent=1 // pred_check
      _
    $region3: #{tpu_custom_call.1} parent=1 // pred_check_branch
      %12 = sbr.rel (0) target = $region5
    $region4: #{tpu_custom_call.1} parent=1 // pred_region
      %s14 = ssub.s32 128, 128
      %15 = vsyncadd [#allocation3], %s14
      %s17 = sshll.u32 [#allocation2], 4
      %s18 = int_to_ptr.vmem [resolvable:$true] %s17
      %20 = dma.hbm_to_vmem [thread:$0]  %s0, 128, %s18, [#allocation3]
    $region5: #{tpu_custom_call.1} parent=1 // pred_fallthru
      _
    // Predicated region
    $region6: #{tpu_custom_call.1} parent=1 // pred_check
      _
    $region7: #{tpu_custom_call.1} parent=1 // pred_check_branch
      %22 = sbr.rel (0) target = $region9
    $region8: #{tpu_custom_call.1} parent=1 // pred_region
      %s24 = ssub.s32 384, 384
      %25 = vsyncadd [#allocation6], %s24
      %s26 = sshll.u32 [#allocation5], 4
      %s27 = int_to_ptr.vmem [resolvable:$true] %s26
      %32 = dma.hbm_to_vmem [thread:$0]  %s1, 384, %s27, [#allocation6], 128, 128, 8
    $region9: #{tpu_custom_call.1} parent=1 // pred_fallthru
      _
    // Predicated region
    $region10: #{tpu_custom_call.1} parent=1 // pred_check
      _
    $region11: #{tpu_custom_call.1} parent=1 // pred_check_branch
      %34 = sbr.rel (0) target = $region13
    $region12: #{tpu_custom_call.1} parent=1 // pred_region
      _
    $region13: #{tpu_custom_call.1} parent=1 // pred_fallthru
      _
    // Predicated region
    $region14: #{tpu_custom_call.1} parent=1 // pred_check
      _
    $region15: #{tpu_custom_call.1} parent=1 // pred_check_branch
      %36 = sbr.rel (0) target = $region17
    $region16: #{tpu_custom_call.1} parent=1 // pred_region
      %37 = dma.done [#allocation3], 128
    $region17: #{tpu_custom_call.1} parent=1 // pred_fallthru
      _
    // Predicated region
    $region18: #{tpu_custom_call.1} parent=1 // pred_check
      _
    $region19: #{tpu_custom_call.1} parent=1 // pred_check_branch
      %39 = sbr.rel (0) target = $region21
    $region20: #{tpu_custom_call.1} parent=1 // pred_region
      %40 = dma.done [#allocation6], 384
    $region21: #{tpu_custom_call.1} parent=1 // pred_fallthru
      _
    %v41 = vld [vmem:[#allocation2] sm:$0xff]
    %v42 = vld [vmem:[#allocation5] sm:$0xff]
    %v43 = vld [vmem:[#allocation5 + $0x8] sm:$0xff]
    %v44 = vld [vmem:[#allocation5 + $0x10] sm:$0xf]
    %v45 = vld [vmem:[%s2] sm:$0x1]
    %v47 = vlaneseq
    %v48 = vshrl.u32 %v47, 7
    %v49 = vsub.s32 0, %v48
    %v50 = vrot.slane %v45, %v49
    %vm52 = vcmask 162816
    %v54 = vsel %vm52, %v41, 0
    %vm56 = vcmask 1043456
    %v58 = vsel %vm56, %v44, 0
    %60 = vmatprep.subr.mxu0 0.0
    %61 = vmatpush1.msra.mxu0 0.0
    %62 = vmatprep.subr.mxu0 0.0
    %63 = vmatpush1.msra.mxu0 0.0
    %64 = vmatprep.subr.mxu0 0.0
    %65 = vmatpush1.msra.mxu0 0.0
    %66 = vmatprep.subr.mxu0 0.0
    %67 = vmatpush1.msra.mxu0 0.0
    %68 = vmatprep.subr.mxu0 0.0
    %69 = vmatpush1.msra.mxu0 0.0
    %70 = vmatprep.subr.mxu0 0.0
    %71 = vmatpush1.msra.mxu0 0.0
    %72 = vmatprep.subr.mxu0 0.0
    %73 = vmatpush1.msra.mxu0 0.0
    %74 = vmatprep.subr.mxu0 0.0
    %75 = vmatpush1.msra.mxu0 0.0
    %76 = vmatprep.subr.mxu0 0.0
    %77 = vmatpush1.msra.mxu0 0.0
    %78 = vmatprep.subr.mxu0 0.0
    %79 = vmatpush1.msra.mxu0 0.0
    %80 = vmatprep.subr.mxu0 0.0
    %81 = vmatpush1.msra.mxu0 0.0
    %82 = vmatprep.subr.mxu0 0.0
    %83 = vmatpush1.msra.mxu0 0.0
    %84 = vmatprep.subr.mxu0 0.0
    %85 = vmatpush1.msra.mxu0 0.0
    %86 = vmatprep.subr.mxu0 0.0
    %87 = vmatpush1.msra.mxu0 %v58
    %88 = vmatprep.subr.mxu0 0.0
    %89 = vmatpush1.msra.mxu0 %v43
    %90 = vmatprep.subr.mxu0 0.0
    %91 = vmatpush1.msra.mxu0 %v42
    %92 = vmatprep.subr.mxu0 0.0
    %93 = vmatpush2.msra.mxu0 0.0
    %94 = vmatprep.subr.mxu0 0.0
    %95 = vmatpush2.msra.mxu0 0.0
    %96 = vmatprep.subr.mxu0 0.0
    %97 = vmatpush2.msra.mxu0 0.0
    %98 = vmatprep.subr.mxu0 0.0
    %99 = vmatpush2.msra.mxu0 0.0
    %100 = vmatprep.subr.mxu0 0.0
    %101 = vmatpush2.msra.mxu0 0.0
    %102 = vmatprep.subr.mxu0 0.0
    %103 = vmatpush2.msra.mxu0 0.0
    %104 = vmatprep.subr.mxu0 0.0
    %105 = vmatpush2.msra.mxu0 0.0
    %106 = vmatprep.subr.mxu0 0.0
    %107 = vmatpush2.msra.mxu0 0.0
    %108 = vmatprep.subr.mxu0 0.0
    %109 = vmatpush2.msra.mxu0 0.0
    %110 = vmatprep.subr.mxu0 0.0
    %111 = vmatpush2.msra.mxu0 0.0
    %112 = vmatprep.subr.mxu0 0.0
    %113 = vmatpush2.msra.mxu0 0.0
    %114 = vmatprep.subr.mxu0 0.0
    %115 = vmatpush2.msra.mxu0 0.0
    %116 = vmatprep.subr.mxu0 0.0
    %117 = vmatpush2.msra.mxu0 0.0
    %118 = vmatprep.subr.mxu0 0.0
    %119 = vmatpush2.msra.mxu0 0.0
    %120 = vmatprep.subr.mxu0 0.0
    %121 = vmatpush2.msra.mxu0 0.0
    %122 = vmatprep.subr.mxu0 0.0
    %123 = vmatpush2.msra.mxu0 0.0
    %124 = vmatprep.mubr.f32.mxu0 0.0
    %125 = vmatmul.mubr.f32.gmra.mxu0 %v54
    %v126 = vpop.f32.mrf.mxu0
    %v127 = vadd.f32 %v50, %v126
    %v128 = vpop.f32.mrf.mxu0
    %129 = vdwg.mxu0
    %130 = vmax.xlane.f32.xlu0 %v127
    %v131 = vpop.xlane.xlu0 %130
    %v132 = vsub.f32 %v127, %v131
    %v133 = vmul.f32 %v132, 1.442695
    %v134 = vpow.pop %v133
    %135 = vadd.xlane.f32.xlu0 %v134
    %v136 = vpop.xlane.xlu0 %135
    %v137 = vrcp.pop %v136
    %v138 = vmul.f32 %v136, %v137
    %v139 = vsub.f32 2.0, %v138
    %v140 = vmul.f32 %v137, %v139
    %v141 = vmul.f32 %v134, %v140
    %142 = vst [vmem:[#allocation7] sm:$0xff] %v141
    // Predicated region
    $region22: #{tpu_custom_call.1} parent=1 // pred_check
      _
    $region23: #{tpu_custom_call.1} parent=1 // pred_check_branch
      %144 = sbr.rel (0) target = $region25
    $region24: #{tpu_custom_call.1} parent=1 // pred_region
      %s146 = ssub.s32 128, 128
      %147 = vsyncadd [#allocation4], %s146
      %s149 = sshll.u32 [#allocation7], 4
      %s150 = int_to_ptr.vmem [resolvable:$true] %s149
      %152 = dma.vmem_to_hbm [thread:$0]  %s150, 128, %s3, [#allocation4]
    $region25: #{tpu_custom_call.1} parent=1 // pred_fallthru
      _
    // Predicated region
    $region26: #{tpu_custom_call.1} parent=1 // pred_check
      _
    $region27: #{tpu_custom_call.1} parent=1 // pred_check_branch
      %154 = sbr.rel (0) target = $region29
    $region28: #{tpu_custom_call.1} parent=1 // pred_region
      %155 = dma.done [#allocation4], 128
    $region29: #{tpu_custom_call.1} parent=1 // pred_fallthru
      _
    %156 = vsyncpa [#allocation3], 1
    %157 = vsyncpa [#allocation6], 1
    %158 = vsyncpa [#allocation4], 1

</llo_original>
